<compile_context>
chip_gen: v6e
topology: v6e:2x2x1
jax: 0.10.0
libtpu: 0.0.40
codegen_flags: <defaults>
</compile_context>

<pallas_src>
import functools

import jax
import jax.numpy as jnp
from jax.experimental import pallas as pl
from jax.experimental.pallas import tpu as pltpu

VOCAB = 128     # vocabulary size (lane-aligned)
DIM = 32        # hidden dim of the stand-in net
MAX_SEQ_LEN = 8


def _round_up(x, m):
    return ((x + m - 1) // m) * m


def ar_loss_kernel(toktgt_ref, table_ref, lse_ref, loss_ref, acc_ref,
                   *, n_true, mask_tail):
    """One TILE_N-row slab of fused model-forward + cross-entropy.

    toktgt_ref : [TILE_N, 2] int32  packed (tok, tgt) rows of this tile
    table_ref  : [V, V]      f32    per-token logits table (emb @ w + b), resident
    lse_ref    : [1, V]      f32    per-token logsumexp of the table, resident
    loss_ref   : [1, 1]      f32    scalar mean loss (written at finalize only)
    acc_ref    : [1, 1]      f32    VMEM scratch accumulator (sum of per-row NLL)
    """
    i = pl.program_id(0)
    tile_n = toktgt_ref.shape[0]
    v = table_ref.shape[1]

    @pl.when(i == 0)
    def _init():
        acc_ref[...] = jnp.zeros_like(acc_ref)

    tok = toktgt_ref[:, 0:1]                                          # [T, 1]
    tgt = toktgt_ref[:, 1:2]                                          # [T, 1]
    vocab_iota = jax.lax.broadcasted_iota(jnp.int32, (tile_n, v), 1)  # [T, V]

    # Model forward for this tile: logits = onehot(tok) @ table (bias folded in).
    one_hot = (tok == vocab_iota).astype(jnp.float32)                 # [T, V]
    logits = jnp.dot(one_hot, table_ref[...],
                     preferred_element_type=jnp.float32)              # [T, V] f32

    # Cross-entropy without any in-kernel exp/log: lse depends only on the
    # token id, so it is a resident [1, V] lookup; both gathers are
    # select+reduce with keepdims ([T, 1] throughout, no 1-D relayouts).
    lse_tok = jnp.sum(jnp.where(tok == vocab_iota, lse_ref[...], 0.0),
                      axis=-1, keepdims=True)                         # [T, 1]
    tgt_logit = jnp.sum(jnp.where(tgt == vocab_iota, logits, 0.0),
                        axis=-1, keepdims=True)                       # [T, 1]
    per_row = lse_tok - tgt_logit                                     # [T, 1]

    # Padded tail rows only exist when n_pad != n_true; compiled out otherwise.
    if mask_tail:
        row = i * tile_n + jax.lax.broadcasted_iota(jnp.int32, (tile_n, 1), 0)
        per_row = jnp.where(row < n_true, per_row, 0.0)

    acc_ref[...] += jnp.sum(per_row, axis=0, keepdims=True)           # [1, 1]

    @pl.when(i == pl.num_programs(0) - 1)
    def _finalize():
        loss_ref[...] = acc_ref[...] * (1.0 / n_true)


@functools.partial(jax.jit, static_argnames=("tile_n",))
def autoregressive_wrapper_forward(x, emb, w, b, *, tile_n=1024):
    """x: [B, T] int32 tokens. Returns scalar f32 loss (mean cross-entropy)."""
    xi = x[:, :-1]
    xo = x[:, 1:]
    n_true = int(xi.shape[0] * xi.shape[1])      # static under jit
    v = emb.shape[0]

    # Collapse the linear stand-in net into a per-token logit table (f32) and
    # precompute the per-token logsumexp once (XLA side, under the same jit).
    w_fused = emb.astype(jnp.float32) @ w.astype(jnp.float32)          # [V, V]
    table = w_fused + b.reshape(1, v).astype(jnp.float32)              # [V, V]
    lse_row = jax.scipy.special.logsumexp(table, axis=-1).reshape(1, v)

    # Row tiling: TILE_N multiple of 8 (sublane); small problems collapse to a
    # single grid step; otherwise pad N up to a tile multiple.
    tile_n = _round_up(max(8, min(tile_n, _round_up(n_true, 8))), 8)
    n_pad = _round_up(n_true, tile_n)

    toktgt = jnp.stack(
        [xi.reshape(-1), xo.reshape(-1)], axis=-1).astype(jnp.int32)   # [N, 2]
    if n_pad != n_true:
        toktgt = jnp.pad(toktgt, ((0, n_pad - n_true), (0, 0)))        # masked rows

    grid = (n_pad // tile_n,)

    out = pl.pallas_call(
        functools.partial(ar_loss_kernel, n_true=n_true,
                          mask_tail=(n_pad != n_true)),
        out_shape=jax.ShapeDtypeStruct((1, 1), jnp.float32),
        grid_spec=pltpu.PrefetchScalarGridSpec(
            num_scalar_prefetch=0,
            grid=grid,
            in_specs=[
                pl.BlockSpec((tile_n, 2), lambda i: (i, 0)),   # packed tok/tgt (pipelined)
                pl.BlockSpec((v, v), lambda i: (0, 0)),        # logit table (resident)
                pl.BlockSpec((1, v), lambda i: (0, 0)),        # lse row (resident)
            ],
            out_specs=pl.BlockSpec((1, 1), lambda i: (0, 0)),  # loss (final write only)
            scratch_shapes=[pltpu.VMEM((1, 1), jnp.float32)],  # running NLL sum
        ),
        compiler_params=pltpu.CompilerParams(
            dimension_semantics=("arbitrary",)),               # accumulation axis
    )(toktgt, table, lse_row)
    return out[0, 0]


def reference_forward(x, emb, w, b):
    """Pure-JAX (f32) reference of the same forward pass."""
    xi = x[:, :-1]
    xo = x[:, 1:]
    h = emb[xi]                                   # [B, T-1, D]
    logits = h @ w + b                            # [B, T-1, V]
    logits = logits.reshape(-1, logits.shape[-1])
    tgt = xo.reshape(-1)
    logz = jax.scipy.special.logsumexp(logits, axis=-1)
    nll = logz - logits[jnp.arange(tgt.shape[0]), tgt]
    return jnp.mean(nll)


if __name__ == "__main__":
    key = jax.random.PRNGKey(0)
    k_emb, k_w, k_b, k_tok, k_tok2 = jax.random.split(key, 5)

    # Deterministic synthetic parameters (shapes implied by the module).
    emb = jax.random.normal(k_emb, (VOCAB, DIM), dtype=jnp.float32) * 0.02
    w = jax.random.normal(k_w, (DIM, VOCAB), dtype=jnp.float32) * 0.02
    b = jax.random.normal(k_b, (VOCAB,), dtype=jnp.float32) * 0.01

    # Case 1: batch=2, seq=max_seq_len+1=9 -> N=16; default tile_n collapses to
    # a single grid step, no tail mask (the common fast path).
    B, T = 2, MAX_SEQ_LEN + 1
    x = jax.random.randint(k_tok, (B, T), 0, VOCAB, dtype=jnp.int32)
    ref = reference_forward(x, emb, w, b)
    loss = jax.block_until_ready(autoregressive_wrapper_forward(x, emb, w, b))
    assert jnp.allclose(loss, ref, rtol=1e-4, atol=1e-4), (loss, ref)

    # Case 2: same data, tile_n=8 -> grid=(2,) (exercises the cross-step
    # accumulator / init / finalize path).
    loss_acc = jax.block_until_ready(
        autoregressive_wrapper_forward(x, emb, w, b, tile_n=8))
    assert jnp.allclose(loss_acc, ref, rtol=1e-4, atol=1e-4), (loss_acc, ref)

    # Case 3: batch=3 -> N=24, tile_n=16 -> padded to 32 rows (exercises the
    # tail-row mask and true-N divisor).
    x2 = jax.random.randint(k_tok2, (3, T), 0, VOCAB, dtype=jnp.int32)
    ref2 = reference_forward(x2, emb, w, b)
    loss2 = jax.block_until_ready(
        autoregressive_wrapper_forward(x2, emb, w, b, tile_n=16))
    assert jnp.allclose(loss2, ref2, rtol=1e-4, atol=1e-4), (loss2, ref2)

    print("KERNEL_OK")
</pallas_src>

<mosaic_0001>
module attributes {stable_mosaic.version = 11 : i64} {
  func.func @ar_loss_kernel(%arg0: i32, %arg1: memref<16x2xi32, #tpu.memory_space<vmem>>, %arg2: memref<128x128xf32, #tpu.memory_space<vmem>>, %arg3: memref<1x128xf32, #tpu.memory_space<vmem>>, %arg4: memref<1x1xf32, #tpu.memory_space<vmem>>, %arg5: memref<1x1xf32, #tpu.memory_space<vmem>>) attributes {dimension_semantics = [#tpu.dimension_semantics<arbitrary>], iteration_bounds = array<i64: 1>, scalar_prefetch = 0 : i64, scratch_operands = 1 : i64, tpu.core_type = #tpu.core_type<tc>, window_params = [{transform_indices = @transform_0, window_bounds = array<i64: 16, 2>}, {pipeline_mode = #tpu.pipeline_mode<synchronous>, transform_indices = @transform_1, window_bounds = array<i64: 128, 128>}, {pipeline_mode = #tpu.pipeline_mode<synchronous>, transform_indices = @transform_2, window_bounds = array<i64: 1, 128>}, {pipeline_mode = #tpu.pipeline_mode<synchronous>, transform_indices = @transform_3, window_bounds = array<i64: 1, 1>}]} {
    %c0_i32 = arith.constant 0 : i32
    %0 = arith.cmpi eq, %arg0, %c0_i32 : i32
    %1 = arith.extui %0 : i1 to i32
    %c0_i32_0 = arith.constant 0 : i32
    %2 = arith.cmpi ne, %1, %c0_i32_0 : i32
    scf.if %2 {
      %cst_18 = arith.constant 0.000000e+00 : f32
      %36 = vector.broadcast %cst_18 : f32 to vector<1x1xf32>
      %c0_19 = arith.constant 0 : index
      %c0_20 = arith.constant 0 : index
      %37 = vector.load %arg5[%c0_19, %c0_20] : memref<1x1xf32, #tpu.memory_space<vmem>>, vector<1x1xf32>
      tpu.vector_store %arg5[%c0_19, %c0_20], %36 {strides = array<i32>} : memref<1x1xf32, #tpu.memory_space<vmem>>, vector<1x1xf32>,
    } else {
    }
    %c0 = arith.constant 0 : index
    %c0_1 = arith.constant 0 : index
    %3 = vector.load %arg1[%c0, %c0_1] : memref<16x2xi32, #tpu.memory_space<vmem>>, vector<16x1xi32>
    %c0_2 = arith.constant 0 : index
    %c1 = arith.constant 1 : index
    %4 = vector.load %arg1[%c0_2, %c1] : memref<16x2xi32, #tpu.memory_space<vmem>>, vector<16x1xi32>
    %5 = tpu.iota {dimensions = array<i32: 1>} : vector<16x128xi32>
    %6 = vector.broadcast %3 : vector<16x1xi32> to vector<16x128xi32>
    %7 = arith.cmpi eq, %6, %5 : vector<16x128xi32>
    %8 = arith.extui %7 : vector<16x128xi1> to vector<16x128xi32>
    %9 = arith.sitofp %8 : vector<16x128xi32> to vector<16x128xf32>
    %c0_3 = arith.constant 0 : index
    %c0_4 = arith.constant 0 : index
    %10 = vector.load %arg2[%c0_3, %c0_4] : memref<128x128xf32, #tpu.memory_space<vmem>>, vector<128x128xf32>
    %cst = arith.constant dense<0.000000e+00> : vector<16x128xf32>
    %11 = tpu.matmul %9, %10, %cst {dimension_numbers = #tpu.dot_dimension_numbers<[1], [0], [0], [1], [0, 0, 1, 1], [], []>} : vector<16x128xf32>, vector<128x128xf32>, vector<16x128xf32> -> vector<16x128xf32>
    %12 = vector.broadcast %3 : vector<16x1xi32> to vector<16x128xi32>
    %13 = arith.cmpi eq, %12, %5 : vector<16x128xi32>
    %c0_5 = arith.constant 0 : index
    %c0_6 = arith.constant 0 : index
    %14 = vector.load %arg3[%c0_5, %c0_6] : memref<1x128xf32, #tpu.memory_space<vmem>>, vector<1x128xf32>
    %cst_7 = arith.constant 0.000000e+00 : f32
    %15 = vector.shape_cast %14 : vector<1x128xf32> to vector<1x128xf32>
    %16 = vector.broadcast %15 : vector<1x128xf32> to vector<16x128xf32>
    %17 = vector.broadcast %cst_7 : f32 to vector<16x128xf32>
    %18 = arith.select %13, %16, %17 : vector<16x128xi1>, vector<16x128xf32>
    %cst_8 = arith.constant dense<0.000000e+00> : vector<16xf32>
    %19 = vector.multi_reduction <add>, %18, %cst_8 [1] : vector<16x128xf32> to vector<16xf32>
    %20 = vector.shape_cast %19 : vector<16xf32> to vector<16x1xf32>
    %21 = vector.broadcast %4 : vector<16x1xi32> to vector<16x128xi32>
    %22 = arith.cmpi eq, %21, %5 : vector<16x128xi32>
    %cst_9 = arith.constant 0.000000e+00 : f32
    %23 = vector.broadcast %cst_9 : f32 to vector<16x128xf32>
    %24 = arith.select %22, %11, %23 : vector<16x128xi1>, vector<16x128xf32>
    %cst_10 = arith.constant dense<0.000000e+00> : vector<16xf32>
    %25 = vector.multi_reduction <add>, %24, %cst_10 [1] : vector<16x128xf32> to vector<16xf32>
    %26 = vector.shape_cast %25 : vector<16xf32> to vector<16x1xf32>
    %27 = arith.subf %20, %26 : vector<16x1xf32>
    %c0_11 = arith.constant 0 : index
    %c0_12 = arith.constant 0 : index
    %28 = vector.load %arg5[%c0_11, %c0_12] : memref<1x1xf32, #tpu.memory_space<vmem>>, vector<1x1xf32>
    %cst_13 = arith.constant dense<0.000000e+00> : vector<1xf32>
    %29 = vector.multi_reduction <add>, %27, %cst_13 [0] : vector<16x1xf32> to vector<1xf32>
    %30 = vector.shape_cast %29 : vector<1xf32> to vector<1x1xf32>
    %31 = arith.addf %28, %30 : vector<1x1xf32>
    %c0_14 = arith.constant 0 : index
    %c0_15 = arith.constant 0 : index
    %32 = vector.load %arg5[%c0_14, %c0_15] : memref<1x1xf32, #tpu.memory_space<vmem>>, vector<1x1xf32>
    tpu.vector_store %arg5[%c0_14, %c0_15], %31 {strides = array<i32>} : memref<1x1xf32, #tpu.memory_space<vmem>>, vector<1x1xf32>,
    %c0_i32_16 = arith.constant 0 : i32
    %33 = arith.cmpi eq, %arg0, %c0_i32_16 : i32
    %34 = arith.extui %33 : i1 to i32
    %c0_i32_17 = arith.constant 0 : i32
    %35 = arith.cmpi ne, %34, %c0_i32_17 : i32
    scf.if %35 {
      %c0_18 = arith.constant 0 : index
      %c0_19 = arith.constant 0 : index
      %36 = vector.load %arg5[%c0_18, %c0_19] : memref<1x1xf32, #tpu.memory_space<vmem>>, vector<1x1xf32>
      %cst_20 = arith.constant 6.250000e-02 : f32
      %37 = vector.broadcast %cst_20 : f32 to vector<1x1xf32>
      %38 = arith.mulf %36, %37 : vector<1x1xf32>
      %c0_21 = arith.constant 0 : index
      %c0_22 = arith.constant 0 : index
      %39 = vector.load %arg4[%c0_21, %c0_22] : memref<1x1xf32, #tpu.memory_space<vmem>>, vector<1x1xf32>
      tpu.vector_store %arg4[%c0_21, %c0_22], %38 {strides = array<i32>} : memref<1x1xf32, #tpu.memory_space<vmem>>, vector<1x1xf32>,
    } else {
    }
    return
  }
  func.func @transform_0(%arg0: i32) -> (i32, i32) {
    %c0_i32 = arith.constant 0 : i32
    %c0_i32_0 = arith.constant 0 : i32
    return %arg0, %c0_i32 : i32, i32
  }
  func.func @transform_1(%arg0: i32) -> (i32, i32) {
    %c0_i32 = arith.constant 0 : i32
    %c0_i32_0 = arith.constant 0 : i32
    %c0_i32_1 = arith.constant 0 : i32
    return %c0_i32, %c0_i32_0 : i32, i32
  }
  func.func @transform_2(%arg0: i32) -> (i32, i32) {
    %c0_i32 = arith.constant 0 : i32
    %c0_i32_0 = arith.constant 0 : i32
    %c0_i32_1 = arith.constant 0 : i32
    return %c0_i32, %c0_i32_0 : i32, i32
  }
  func.func @transform_3(%arg0: i32) -> (i32, i32) {
    %c0_i32 = arith.constant 0 : i32
    %c0_i32_0 = arith.constant 0 : i32
    %c0_i32_1 = arith.constant 0 : i32
    return %c0_i32, %c0_i32_0 : i32, i32
  }
}

</mosaic_0001>

<llo_original>
// kernel: autoregressive_wrapper_forward.1
$region0: #{autoregressive_wrapper_forward.1}
  #allocation0 [shape = 'u32[]', space=smem, size = 0x4, offset = 0x4, fixed_abs, tag = 'smem constant byte address 0x4 - core index']
  #allocation1 [shape = 'u32[144,128]{1,0:T(1,128)}', space=vmem, size = 0x12000, scoped, tag = 'internal scratch']
  #allocation2 [shape = 'f32[1,1]{1,0:T(1,128)}', space=vmem, size = 0x200, scoped, tag = 'scratch operand']
  %s0 = inlined_call_operand.vmem [shape: s32[16,2], index: 0, kind: input, shape index: {}]
  %s1 = inlined_call_operand.vmem [shape: f32[128,128], index: 1, kind: input, shape index: {}]
  %s2 = inlined_call_operand.vmem [shape: f32[1,128], index: 2, kind: input, shape index: {}]
  %s3 = inlined_call_operand.hbm [shape: f32[1,1], index: 3, kind: output, shape index: {}]
  %s4 = sld [smem:[#allocation0]]
  $region30: #{autoregressive_wrapper_forward.1} parent=0
    _
  %s6 = ssub.s32 1, %s4
  %s7 = scalar_select 0, %s6, %s4
  $region1: #{autoregressive_wrapper_forward.1} parent=0
    #allocation3 [shape = 'u8[512]{0}', space=vmem, size = 0x400, scoped, tag = 'output window, operand 0, single buffered']
    #allocation4 [shape = 's32[1]{0}', space=sflag, size = 0x4, scoped, tag = 'scoped memory for autoregressive_wrapper_forward.1']
    %8 = vsyncpa [#allocation4], 0
    // Predicated region
    $region2: #{autoregressive_wrapper_forward.1} parent=1 // pred_check
      _
    $region3: #{autoregressive_wrapper_forward.1} parent=1 // pred_check_branch
      %10 = sbr.rel (0) target = $region5
    $region4: #{autoregressive_wrapper_forward.1} parent=1 // pred_region
      _
    $region5: #{autoregressive_wrapper_forward.1} parent=1 // pred_fallthru
      _
    // Predicated region
    $region6: #{autoregressive_wrapper_forward.1} parent=1 // pred_check
      _
    $region7: #{autoregressive_wrapper_forward.1} parent=1 // pred_check_branch
      %12 = sbr.rel (0) target = $region9
    $region8: #{autoregressive_wrapper_forward.1} parent=1 // pred_region
      _
    $region9: #{autoregressive_wrapper_forward.1} parent=1 // pred_fallthru
      _
    // Predicated region
    $region10: #{autoregressive_wrapper_forward.1} parent=1 // pred_check
      _
    $region11: #{autoregressive_wrapper_forward.1} parent=1 // pred_check_branch
      %14 = sbr.rel (0) target = $region13
    $region12: #{autoregressive_wrapper_forward.1} parent=1 // pred_region
      _
    $region13: #{autoregressive_wrapper_forward.1} parent=1 // pred_fallthru
      _
    %p15 = scmp.eq.s32.totalorder 0, 0
    // Predicated region
    $region14: #{autoregressive_wrapper_forward.1} parent=1 // pred_check
      %p16 = pneg %p15
    $region15: #{autoregressive_wrapper_forward.1} parent=1 // pred_check_branch
      %18 = sbr.rel (%p16) target = $region17
    $region16: #{autoregressive_wrapper_forward.1} parent=1 // pred_region
      %vm19 = vcmask 0
      %20 = vst.msk [vmem:[#allocation2] sm:$0x1] %vm19, 0.0
    $region17: #{autoregressive_wrapper_forward.1} parent=1 // pred_fallthru
      _
    %v21 = vld [vmem:[%s0] sm:$0xff]
    %v22 = vld [vmem:[%s0 + $0x8] sm:$0xff]
    %v23 = vlaneseq
    %v24 = vand.u32 %v23, 127
    %25 = vset.pattern.permute.xlu0 0
    %26 = vperm.xlu0 %25, %v21
    %v27 = vpop.permute.xlu0 %26
    %28 = vset.pattern.permute.xlu0 0
    %29 = vperm.xlu0 %28, %v22
    %v30 = vpop.permute.xlu0 %29
    %vm31 = vcmp.eq.s32.totalorder %v27, %v24
    %vm32 = vcmp.eq.s32.totalorder %v30, %v24
    %v33 = vsel %vm31, 1, 0
    %v34 = vsel %vm32, 1, 0
    %v35 = vcvt.s32.f32 %v33
    %v36 = vcvt.s32.f32 %v34
    %v37 = vld [vmem:[%s1] sm:$0xff]
    %v38 = vld [vmem:[%s1 + $0x8] sm:$0xff]
    %v39 = vld [vmem:[%s1 + $0x10] sm:$0xff]
    %v40 = vld [vmem:[%s1 + $0x18] sm:$0xff]
    %v41 = vld [vmem:[%s1 + $0x20] sm:$0xff]
    %v42 = vld [vmem:[%s1 + $0x28] sm:$0xff]
    %v43 = vld [vmem:[%s1 + $0x30] sm:$0xff]
    %v44 = vld [vmem:[%s1 + $0x38] sm:$0xff]
    %v45 = vld [vmem:[%s1 + $0x40] sm:$0xff]
    %v46 = vld [vmem:[%s1 + $0x48] sm:$0xff]
    %v47 = vld [vmem:[%s1 + $0x50] sm:$0xff]
    %v48 = vld [vmem:[%s1 + $0x58] sm:$0xff]
    %v49 = vld [vmem:[%s1 + $0x60] sm:$0xff]
    %v50 = vld [vmem:[%s1 + $0x68] sm:$0xff]
    %v51 = vld [vmem:[%s1 + $0x70] sm:$0xff]
    %v52 = vld [vmem:[%s1 + $0x78] sm:$0xff]
    %53 = vmatprep.subr.mxu0 0.0
    %54 = vmatpush1.msra.mxu0 %v52
    %55 = vmatprep.subr.mxu0 0.0
    %56 = vmatpush1.msra.mxu0 %v51
    %57 = vmatprep.subr.mxu0 0.0
    %58 = vmatpush1.msra.mxu0 %v50
    %59 = vmatprep.subr.mxu0 0.0
    %60 = vmatpush1.msra.mxu0 %v49
    %61 = vmatprep.subr.mxu0 0.0
    %62 = vmatpush1.msra.mxu0 %v48
    %63 = vmatprep.subr.mxu0 0.0
    %64 = vmatpush1.msra.mxu0 %v47
    %65 = vmatprep.subr.mxu0 0.0
    %66 = vmatpush1.msra.mxu0 %v46
    %67 = vmatprep.subr.mxu0 0.0
    %68 = vmatpush1.msra.mxu0 %v45
    %69 = vmatprep.subr.mxu0 0.0
    %70 = vmatpush1.msra.mxu0 %v44
    %71 = vmatprep.subr.mxu0 0.0
    %72 = vmatpush1.msra.mxu0 %v43
    %73 = vmatprep.subr.mxu0 0.0
    %74 = vmatpush1.msra.mxu0 %v42
    %75 = vmatprep.subr.mxu0 0.0
    %76 = vmatpush1.msra.mxu0 %v41
    %77 = vmatprep.subr.mxu0 0.0
    %78 = vmatpush1.msra.mxu0 %v40
    %79 = vmatprep.subr.mxu0 0.0
    %80 = vmatpush1.msra.mxu0 %v39
    %81 = vmatprep.subr.mxu0 0.0
    %82 = vmatpush1.msra.mxu0 %v38
    %83 = vmatprep.subr.mxu0 0.0
    %84 = vmatpush1.msra.mxu0 %v37
    %85 = vmatprep.subr.mxu0 0.0
    %86 = vmatpush2.msra.mxu0 0.0
    %87 = vmatprep.subr.mxu0 0.0
    %88 = vmatpush2.msra.mxu0 0.0
    %89 = vmatprep.subr.mxu0 0.0
    %90 = vmatpush2.msra.mxu0 0.0
    %91 = vmatprep.subr.mxu0 0.0
    %92 = vmatpush2.msra.mxu0 0.0
    %93 = vmatprep.subr.mxu0 0.0
    %94 = vmatpush2.msra.mxu0 0.0
    %95 = vmatprep.subr.mxu0 0.0
    %96 = vmatpush2.msra.mxu0 0.0
    %97 = vmatprep.subr.mxu0 0.0
    %98 = vmatpush2.msra.mxu0 0.0
    %99 = vmatprep.subr.mxu0 0.0
    %100 = vmatpush2.msra.mxu0 0.0
    %101 = vmatprep.subr.mxu0 0.0
    %102 = vmatpush2.msra.mxu0 0.0
    %103 = vmatprep.subr.mxu0 0.0
    %104 = vmatpush2.msra.mxu0 0.0
    %105 = vmatprep.subr.mxu0 0.0
    %106 = vmatpush2.msra.mxu0 0.0
    %107 = vmatprep.subr.mxu0 0.0
    %108 = vmatpush2.msra.mxu0 0.0
    %109 = vmatprep.subr.mxu0 0.0
    %110 = vmatpush2.msra.mxu0 0.0
    %111 = vmatprep.subr.mxu0 0.0
    %112 = vmatpush2.msra.mxu0 0.0
    %113 = vmatprep.subr.mxu0 0.0
    %114 = vmatpush2.msra.mxu0 0.0
    %115 = vmatprep.subr.mxu0 0.0
    %116 = vmatpush2.msra.mxu0 0.0
    %117 = vmatprep.mubr.f32.mxu0 0.0
    %118 = vmatmul.mubr.f32.gmra.mxu0 %v35
    %v119 = vpop.f32.mrf.mxu0
    %v120 = vadd.f32 0.0, %v119
    %v121 = vpop.f32.mrf.mxu0
    %122 = vmatprep.mubr.f32.mxu0 0.0
    %123 = vmatmul.mubr.f32.gmra.mxu0 %v36
    %v124 = vpop.f32.mrf.mxu0
    %v125 = vadd.f32 0.0, %v124
    %v126 = vpop.f32.mrf.mxu0
    %127 = vdwg.mxu0
    %v128 = vld [vmem:[%s2] sm:$0x1]
    %v130 = vlaneseq
    %v131 = vshrl.u32 %v130, 7
    %v132 = vsub.s32 0, %v131
    %v133 = vrot.slane %v128, %v132
    %v135 = vsel %vm31, %v133, 0.0
    %v136 = vsel %vm32, %v133, 0.0
    %137 = vadd.xlane.f32.xlu0 %v135
    %v138 = vpop.xlane.xlu0 %137
    %139 = vadd.xlane.f32.xlu0 %v136
    %v140 = vpop.xlane.xlu0 %139
    %141 = vset.pattern.permute.xlu0 1
    %142 = vperm.xlu0 %141, %v21
    %v143 = vpop.permute.xlu0 %142
    %144 = vset.pattern.permute.xlu0 1
    %145 = vperm.xlu0 %144, %v22
    %v146 = vpop.permute.xlu0 %145
    %vm147 = vcmp.eq.s32.totalorder %v143, %v24
    %vm148 = vcmp.eq.s32.totalorder %v146, %v24
    %v149 = vsel %vm147, %v120, 0.0
    %v150 = vsel %vm148, %v125, 0.0
    %151 = vadd.xlane.f32.xlu0 %v149
    %v152 = vpop.xlane.xlu0 %151
    %153 = vadd.xlane.f32.xlu0 %v150
    %v154 = vpop.xlane.xlu0 %153
    %v155 = vsub.f32 %v138, %v152
    %v156 = vsub.f32 %v140, %v154
    %v157 = vld [vmem:[#allocation2] sm:$0x1]
    %v158 = vadd.f32 %v155, %v156
    %v159 = vrot.slane %v158, 4
    %v160 = vadd.f32 %v158, %v159
    %v161 = vrot.slane %v160, 2
    %v162 = vadd.f32 %v160, %v161
    %v163 = vrot.slane %v162, 1
    %v164 = vadd.f32 %v162, %v163
    %v165 = vadd.f32 %v157, %v164
    %vm166 = vcmask 0
    %167 = vst.msk [vmem:[#allocation2] sm:$0x1] %vm166, %v165
    // Predicated region
    $region18: #{autoregressive_wrapper_forward.1} parent=1 // pred_check
      %p168 = pneg %p15
    $region19: #{autoregressive_wrapper_forward.1} parent=1 // pred_check_branch
      %170 = sbr.rel (%p168) target = $region21
    $region20: #{autoregressive_wrapper_forward.1} parent=1 // pred_region
      %v171 = vld [vmem:[#allocation2] sm:$0x1]
      %v172 = vmul.f32 %v171, 0.0625
      %173 = vst.msk [vmem:[#allocation3] sm:$0x1] %vm166, %v172
    $region21: #{autoregressive_wrapper_forward.1} parent=1 // pred_fallthru
      _
    // Predicated region
    $region22: #{autoregressive_wrapper_forward.1} parent=1 // pred_check
      _
    $region23: #{autoregressive_wrapper_forward.1} parent=1 // pred_check_branch
      %175 = sbr.rel (0) target = $region25
    $region24: #{autoregressive_wrapper_forward.1} parent=1 // pred_region
      %s177 = ssub.s32 16, 16
      %178 = vsyncadd [#allocation4], %s177
      %s180 = sshll.u32 [#allocation3], 4
      %s181 = int_to_ptr.vmem [resolvable:$true] %s180
      %183 = dma.vmem_to_hbm [thread:$0]  %s181, 16, %s3, [#allocation4]
    $region25: #{autoregressive_wrapper_forward.1} parent=1 // pred_fallthru
      _
    // Predicated region
    $region26: #{autoregressive_wrapper_forward.1} parent=1 // pred_check
      _
    $region27: #{autoregressive_wrapper_forward.1} parent=1 // pred_check_branch
      %185 = sbr.rel (0) target = $region29
    $region28: #{autoregressive_wrapper_forward.1} parent=1 // pred_region
      %186 = dma.done [#allocation4], 16
    $region29: #{autoregressive_wrapper_forward.1} parent=1 // pred_fallthru
      _
    %187 = vsyncpa [#allocation4], 1

</llo_original>
